<compile_context>
chip_gen: v6e
topology: v6e:2x2x1
jax: 0.10.0
libtpu: 0.0.40
codegen_flags: <defaults>
</compile_context>

<pallas_src>
import functools

import jax
import jax.numpy as jnp
from jax.experimental import pallas as pl
from jax.experimental.pallas import tpu as pltpu


def _tv_kernel(x_ref, wh_ref, ww_ref, o_ref, *, W, HWp):
    # x_ref : (TN, HWp) block of flattened, zero-padded image slices.
    # wh_ref/ww_ref : (1, HWp) weight rows (mask * 2*weight/(B*count_*)),
    #                 resident in VMEM via a constant index_map.
    xv = x_ref[...].astype(jnp.float32)

    # Vertical neighbour x[h+1, w] lives at flat index i + W.
    dh = pltpu.roll(xv, (HWp - W) % HWp, 1) - xv
    # Horizontal neighbour x[h, w+1] lives at flat index i + 1.
    dw = pltpu.roll(xv, (HWp - 1) % HWp, 1) - xv

    # Invalid / padded positions have zero weight, so no iota / modulo /
    # select work is needed per element.
    val = dh * dh * wh_ref[...] + dw * dw * ww_ref[...]

    # Full in-kernel reduction: one lane-dense (1, 128) row per grid step
    # (the wrapper reads lane 0), instead of a (1, H*W) partial-sum row.
    total = jnp.sum(val)
    o_ref[...] = jnp.broadcast_to(total, (1, 128)).astype(jnp.float32)


def l_tv_pallas(x, tv_loss_weight=1.0):
    """Pallas TPU implementation of L_TV.forward (total-variation loss)."""
    B, C, H, W = x.shape
    N = B * C
    HW = H * W
    count_h = (H - 1) * W
    count_w = H * (W - 1)
    # TODO(synk): H == 1 or W == 1 gives count_* == 0; the weight rows then see
    # an inf scale on an empty mask (result 0.0) instead of the reference's nan.

    itemsize = jnp.dtype(x.dtype).itemsize

    # Pad the flattened H*W axis to a multiple of 128 so vregs are fully
    # populated and stores are unmasked; the weight rows zero the padded tail.
    HWp = pl.cdiv(HW, 128) * 128

    # Resident weight rows with the scale folded in.  Computed with jnp so a
    # traced tv_loss_weight also works.
    scale = 2.0 * jnp.float32(tv_loss_weight) / B
    lane = jnp.arange(HWp, dtype=jnp.int32)
    wh = jnp.where(lane < (HW - W), scale / jnp.float32(count_h), 0.0)
    ww = jnp.where((lane < HW) & ((lane % W) != (W - 1)),
                   scale / jnp.float32(count_w), 0.0)
    wh = wh.astype(jnp.float32).reshape(1, HWp)
    ww = ww.astype(jnp.float32).reshape(1, HWp)

    xr = x.reshape(N, HW)

    # Block sizing: ~8 MiB of input bytes per block, capped at 2M elements so
    # the f32 roll temporaries + double-buffered input stay well inside v7x's
    # 64 MiB/TC VMEM (v5e/v6e have 128 MiB physical).
    target_bytes = 8 * 1024 * 1024
    tn = max(1, target_bytes // (HWp * itemsize))
    max_f32_elems = (8 * 1024 * 1024) // 4
    tn = min(tn, max(1, max_f32_elems // HWp))
    tn = max(8, (tn // 8) * 8)                 # sublane alignment

    n_aligned = pl.cdiv(N, 8) * 8
    tn = min(tn, n_aligned)
    grid = pl.cdiv(n_aligned, tn)
    # Give both v7x TensorCores work when there is enough of it.
    if grid == 1 and n_aligned >= 16:
        tn = pl.cdiv(pl.cdiv(n_aligned, 2), 8) * 8
        grid = pl.cdiv(n_aligned, tn)

    n_pad = grid * tn
    if n_pad != N or HWp != HW:
        # Zero padding contributes exactly zero to both TV terms.
        xr = jnp.pad(xr, ((0, n_pad - N), (0, HWp - HW)))

    kernel = functools.partial(_tv_kernel, W=W, HWp=HWp)

    out = pl.pallas_call(
        kernel,
        out_shape=jax.ShapeDtypeStruct((grid, 128), jnp.float32),
        grid=(grid,),
        in_specs=[
            pl.BlockSpec((tn, HWp), lambda i: (i, 0)),
            pl.BlockSpec((1, HWp), lambda i: (0, 0)),   # wh stays resident
            pl.BlockSpec((1, HWp), lambda i: (0, 0)),   # ww stays resident
        ],
        out_specs=pl.BlockSpec((1, 128), lambda i: (i, 0)),
        compiler_params=pltpu.CompilerParams(
            dimension_semantics=("parallel",),
            vmem_limit_bytes=48 * 1024 * 1024,
        ),
        cost_estimate=pl.CostEstimate(
            flops=8 * n_pad * HWp,
            transcendentals=0,
            bytes_accessed=n_pad * HWp * itemsize + 2 * HWp * 4 + grid * 128 * 4,
        ),
    )(xr, wh, ww)

    # Tiny final reduction of per-step totals (scale already folded in).
    return jnp.sum(out[:, 0])


def l_tv_reference(x, tv_loss_weight=1.0):
    B, C, H, W = x.shape
    count_h = (H - 1) * W
    count_w = H * (W - 1)
    x32 = x.astype(jnp.float32)
    h_tv = jnp.sum(jnp.square(x32[:, :, 1:, :] - x32[:, :, : H - 1, :]))
    w_tv = jnp.sum(jnp.square(x32[:, :, :, 1:] - x32[:, :, :, : W - 1]))
    return tv_loss_weight * 2.0 * (h_tv / count_h + w_tv / count_w) / B


if __name__ == "__main__":
    key = jax.random.PRNGKey(0)
    x = jax.random.normal(key, (2, 4, 16, 16), dtype=jnp.float32)

    out = l_tv_pallas(x, tv_loss_weight=1.0)
    out = jax.block_until_ready(out)

    ref = l_tv_reference(x, tv_loss_weight=1.0)
    assert jnp.allclose(out, ref, rtol=1e-5, atol=1e-5), (out, ref)

    print("KERNEL_OK")
</pallas_src>

<mosaic_0001>
module attributes {stable_mosaic.version = 11 : i64} {
  func.func @_tv_kernel(%arg0: i32, %arg1: memref<8x256xf32, #tpu.memory_space<vmem>>, %arg2: memref<1x256xf32, #tpu.memory_space<vmem>>, %arg3: memref<1x256xf32, #tpu.memory_space<vmem>>, %arg4: memref<1x128xf32, #tpu.memory_space<vmem>>) attributes {dimension_semantics = [#tpu.dimension_semantics<parallel>], iteration_bounds = array<i64: 1>, scalar_prefetch = 0 : i64, scratch_operands = 0 : i64, tpu.core_type = #tpu.core_type<tc>, window_params = [{transform_indices = @transform_0, window_bounds = array<i64: 8, 256>}, {pipeline_mode = #tpu.pipeline_mode<synchronous>, transform_indices = @transform_1, window_bounds = array<i64: 1, 256>}, {pipeline_mode = #tpu.pipeline_mode<synchronous>, transform_indices = @transform_2, window_bounds = array<i64: 1, 256>}, {transform_indices = @transform_3, window_bounds = array<i64: 1, 128>}]} {
    %c0 = arith.constant 0 : index
    %c0_0 = arith.constant 0 : index
    %0 = vector.load %arg1[%c0, %c0_0] : memref<8x256xf32, #tpu.memory_space<vmem>>, vector<8x256xf32>
    %c240_i32 = arith.constant 240 : i32
    %1 = tpu.dynamic_rotate %0 by %c240_i32 dim 1 : vector<8x256xf32>, i32 -> vector<8x256xf32>
    %2 = arith.subf %1, %0 : vector<8x256xf32>
    %c255_i32 = arith.constant 255 : i32
    %3 = tpu.dynamic_rotate %0 by %c255_i32 dim 1 : vector<8x256xf32>, i32 -> vector<8x256xf32>
    %4 = arith.subf %3, %0 : vector<8x256xf32>
    %5 = arith.mulf %2, %2 : vector<8x256xf32>
    %c0_1 = arith.constant 0 : index
    %c0_2 = arith.constant 0 : index
    %6 = vector.load %arg2[%c0_1, %c0_2] : memref<1x256xf32, #tpu.memory_space<vmem>>, vector<1x256xf32>
    %7 = vector.broadcast %6 : vector<1x256xf32> to vector<8x256xf32>
    %8 = arith.mulf %5, %7 : vector<8x256xf32>
    %9 = arith.mulf %4, %4 : vector<8x256xf32>
    %c0_3 = arith.constant 0 : index
    %c0_4 = arith.constant 0 : index
    %10 = vector.load %arg3[%c0_3, %c0_4] : memref<1x256xf32, #tpu.memory_space<vmem>>, vector<1x256xf32>
    %11 = vector.broadcast %10 : vector<1x256xf32> to vector<8x256xf32>
    %12 = arith.mulf %9, %11 : vector<8x256xf32>
    %13 = arith.addf %8, %12 : vector<8x256xf32>
    %14 = vector.shape_cast %13 : vector<8x256xf32> to vector<1x8x256xf32>
    %cst = arith.constant dense<0.000000e+00> : vector<1xf32>
    %15 = vector.multi_reduction <add>, %14, %cst [1, 2] : vector<1x8x256xf32> to vector<1xf32>
    %16 = vector.shape_cast %15 : vector<1xf32> to vector<1x1x1xf32>
    %17 = vector.extract %16[0, 0, 0] : f32 from vector<1x1x1xf32>
    %18 = vector.broadcast %17 : f32 to vector<1x128xf32>
    %c0_5 = arith.constant 0 : index
    %c0_6 = arith.constant 0 : index
    %19 = vector.load %arg4[%c0_5, %c0_6] : memref<1x128xf32, #tpu.memory_space<vmem>>, vector<1x128xf32>
    tpu.vector_store %arg4[%c0_5, %c0_6], %18 {strides = array<i32>} : memref<1x128xf32, #tpu.memory_space<vmem>>, vector<1x128xf32>,
    return
  }
  func.func @transform_0(%arg0: i32) -> (i32, i32) {
    %c0_i32 = arith.constant 0 : i32
    %c0_i32_0 = arith.constant 0 : i32
    return %arg0, %c0_i32 : i32, i32
  }
  func.func @transform_1(%arg0: i32) -> (i32, i32) {
    %c0_i32 = arith.constant 0 : i32
    %c0_i32_0 = arith.constant 0 : i32
    %c0_i32_1 = arith.constant 0 : i32
    return %c0_i32, %c0_i32_0 : i32, i32
  }
  func.func @transform_2(%arg0: i32) -> (i32, i32) {
    %c0_i32 = arith.constant 0 : i32
    %c0_i32_0 = arith.constant 0 : i32
    %c0_i32_1 = arith.constant 0 : i32
    return %c0_i32, %c0_i32_0 : i32, i32
  }
  func.func @transform_3(%arg0: i32) -> (i32, i32) {
    %c0_i32 = arith.constant 0 : i32
    %c0_i32_0 = arith.constant 0 : i32
    return %arg0, %c0_i32 : i32, i32
  }
}

</mosaic_0001>

<llo_original>
// kernel: tpu_custom_call.1
$region0: #{tpu_custom_call.1}
  #allocation0 [shape = 'u32[]', space=smem, size = 0x4, offset = 0x4, fixed_abs, tag = 'smem constant byte address 0x4 - core index']
  #allocation1 [shape = 'u32[144,128]{1,0:T(1,128)}', space=vmem, size = 0x12000, scoped, tag = 'internal scratch']
  %s0 = inlined_call_operand.hbm [shape: f32[8,256], index: 0, kind: input, shape index: {}]
  %s1 = inlined_call_operand.hbm [shape: f32[1,256], index: 1, kind: input, shape index: {}]
  %s2 = inlined_call_operand.vmem [shape: f32[1,256], index: 2, kind: input, shape index: {}]
  %s3 = inlined_call_operand.hbm [shape: f32[1,128], index: 3, kind: output, shape index: {}]
  %s4 = sld [smem:[#allocation0]]
  $region30: #{tpu_custom_call.1} parent=0
    _
  %s6 = ssub.s32 1, %s4
  %s7 = scalar_select 0, %s6, %s4
  $region1: #{tpu_custom_call.1} parent=0
    #allocation2 [shape = 'u8[8192]{0}', space=vmem, size = 0x2000, scoped, tag = 'input window, operand 0, single buffered']
    #allocation3 [shape = 's32[1]{0}', space=sflag, size = 0x4, scoped, tag = 'scoped memory for tpu_custom_call.1']
    #allocation4 [shape = 's32[1]{0}', space=sflag, size = 0x4, scoped, tag = 'scoped memory for tpu_custom_call.1']
    #allocation5 [shape = 'u8[1024]{0}', space=vmem, size = 0x400, scoped, tag = 'input window, operand 1, single buffered']
    #allocation6 [shape = 's32[1]{0}', space=sflag, size = 0x4, scoped, tag = 'scoped memory for tpu_custom_call.1']
    #allocation7 [shape = 'u8[512]{0}', space=vmem, size = 0x400, scoped, tag = 'output window, operand 0, single buffered']
    %8 = vsyncpa [#allocation3], 0
    %9 = vsyncpa [#allocation6], 0
    %10 = vsyncpa [#allocation4], 0
    // Predicated region
    $region2: #{tpu_custom_call.1} parent=1 // pred_check
      _
    $region3: #{tpu_custom_call.1} parent=1 // pred_check_branch
      %12 = sbr.rel (0) target = $region5
    $region4: #{tpu_custom_call.1} parent=1 // pred_region
      %s14 = ssub.s32 256, 256
      %15 = vsyncadd [#allocation3], %s14
      %s17 = sshll.u32 [#allocation2], 4
      %s18 = int_to_ptr.vmem [resolvable:$true] %s17
      %20 = dma.hbm_to_vmem [thread:$0]  %s0, 256, %s18, [#allocation3]
    $region5: #{tpu_custom_call.1} parent=1 // pred_fallthru
      _
    // Predicated region
    $region6: #{tpu_custom_call.1} parent=1 // pred_check
      _
    $region7: #{tpu_custom_call.1} parent=1 // pred_check_branch
      %22 = sbr.rel (0) target = $region9
    $region8: #{tpu_custom_call.1} parent=1 // pred_region
      %s24 = ssub.s32 32, 32
      %25 = vsyncadd [#allocation6], %s24
      %s27 = sshll.u32 [#allocation5], 4
      %s28 = int_to_ptr.vmem [resolvable:$true] %s27
      %30 = dma.hbm_to_vmem [thread:$0]  %s1, 32, %s28, [#allocation6]
    $region9: #{tpu_custom_call.1} parent=1 // pred_fallthru
      _
    // Predicated region
    $region10: #{tpu_custom_call.1} parent=1 // pred_check
      _
    $region11: #{tpu_custom_call.1} parent=1 // pred_check_branch
      %32 = sbr.rel (0) target = $region13
    $region12: #{tpu_custom_call.1} parent=1 // pred_region
      _
    $region13: #{tpu_custom_call.1} parent=1 // pred_fallthru
      _
    // Predicated region
    $region14: #{tpu_custom_call.1} parent=1 // pred_check
      _
    $region15: #{tpu_custom_call.1} parent=1 // pred_check_branch
      %34 = sbr.rel (0) target = $region17
    $region16: #{tpu_custom_call.1} parent=1 // pred_region
      %35 = dma.done [#allocation3], 256
    $region17: #{tpu_custom_call.1} parent=1 // pred_fallthru
      _
    // Predicated region
    $region18: #{tpu_custom_call.1} parent=1 // pred_check
      _
    $region19: #{tpu_custom_call.1} parent=1 // pred_check_branch
      %37 = sbr.rel (0) target = $region21
    $region20: #{tpu_custom_call.1} parent=1 // pred_region
      %38 = dma.done [#allocation6], 32
    $region21: #{tpu_custom_call.1} parent=1 // pred_fallthru
      _
    %v39 = vld [vmem:[#allocation2] sm:$0xff]
    %v40 = vld [vmem:[#allocation2 + $0x8] sm:$0xff]
    %41 = vrot.lane.b32.xlu0 %v39, 112
    %v42 = vpop.permute.xlu0 %41
    %43 = vrot.lane.b32.xlu0 %v40, 112
    %v44 = vpop.permute.xlu0 %43
    %v45 = vlaneseq
    %v46 = vand.u32 %v45, 127
    %vm47 = vcmp.lt.s32.totalorder %v46, 112
    %v48 = vsel %vm47, %v42, %v44
    %v49 = vsel %vm47, %v44, %v42
    %v50 = vsub.f32 %v48, %v39
    %v51 = vsub.f32 %v49, %v40
    %52 = vrot.lane.b32.xlu0 %v39, 127
    %v53 = vpop.permute.xlu0 %52
    %54 = vrot.lane.b32.xlu0 %v40, 127
    %v55 = vpop.permute.xlu0 %54
    %vm56 = vcmp.lt.s32.totalorder %v46, 127
    %v57 = vsel %vm56, %v53, %v55
    %v58 = vsel %vm56, %v55, %v53
    %v59 = vsub.f32 %v57, %v39
    %v60 = vsub.f32 %v58, %v40
    %v61 = vmul.f32 %v50, %v50
    %v62 = vmul.f32 %v51, %v51
    %v63 = vld [vmem:[#allocation5] sm:$0x3]
    %v65 = vlaneseq
    %v66 = vshrl.u32 %v65, 7
    %v67 = vsub.s32 0, %v66
    %v68 = vrot.slane %v63, %v67
    %v69 = vlaneseq
    %v70 = vshrl.u32 %v69, 7
    %v71 = vsub.s32 1, %v70
    %v72 = vrot.slane %v63, %v71
    %v75 = vmul.f32 %v61, %v68
    %v76 = vmul.f32 %v62, %v72
    %v77 = vmul.f32 %v59, %v59
    %v78 = vmul.f32 %v60, %v60
    %v79 = vld [vmem:[%s2] sm:$0x3]
    %v81 = vlaneseq
    %v82 = vshrl.u32 %v81, 7
    %v83 = vsub.s32 0, %v82
    %v84 = vrot.slane %v79, %v83
    %v85 = vlaneseq
    %v86 = vshrl.u32 %v85, 7
    %v87 = vsub.s32 1, %v86
    %v88 = vrot.slane %v79, %v87
    %v91 = vmul.f32 %v77, %v84
    %v92 = vmul.f32 %v78, %v88
    %v93 = vadd.f32 %v75, %v91
    %v94 = vadd.f32 %v76, %v92
    %v95 = vadd.f32 %v93, %v94
    %96 = vadd.xlane.f32.xlu0 %v95
    %v97 = vpop.xlane.xlu0 %96
    %v98 = vrot.slane %v97, 4
    %v99 = vadd.f32 %v97, %v98
    %v100 = vrot.slane %v99, 2
    %v101 = vadd.f32 %v99, %v100
    %v102 = vrot.slane %v101, 1
    %v103 = vadd.f32 %v101, %v102
    %s104 = vtos %v103
    %v105 = vstv %s104
    %106 = vst [vmem:[#allocation7] sm:$0x1] %v105
    // Predicated region
    $region22: #{tpu_custom_call.1} parent=1 // pred_check
      _
    $region23: #{tpu_custom_call.1} parent=1 // pred_check_branch
      %108 = sbr.rel (0) target = $region25
    $region24: #{tpu_custom_call.1} parent=1 // pred_region
      %s110 = ssub.s32 16, 16
      %111 = vsyncadd [#allocation4], %s110
      %s113 = sshll.u32 [#allocation7], 4
      %s114 = int_to_ptr.vmem [resolvable:$true] %s113
      %116 = dma.vmem_to_hbm [thread:$0]  %s114, 16, %s3, [#allocation4]
    $region25: #{tpu_custom_call.1} parent=1 // pred_fallthru
      _
    // Predicated region
    $region26: #{tpu_custom_call.1} parent=1 // pred_check
      _
    $region27: #{tpu_custom_call.1} parent=1 // pred_check_branch
      %118 = sbr.rel (0) target = $region29
    $region28: #{tpu_custom_call.1} parent=1 // pred_region
      %119 = dma.done [#allocation4], 16
    $region29: #{tpu_custom_call.1} parent=1 // pred_fallthru
      _
    %120 = vsyncpa [#allocation3], 1
    %121 = vsyncpa [#allocation6], 1
    %122 = vsyncpa [#allocation4], 1

</llo_original>
